<compile_context>
chip_gen: v5e
topology: v5e:2x2
jax: 0.10.0
libtpu: 0.0.40
codegen_flags: <defaults>
</compile_context>

<pallas_src>
import functools

import jax
import jax.numpy as jnp
from jax.experimental import pallas as pl
from jax.experimental.pallas import tpu as pltpu

ALPHA = 1.0
GAMMA = 2.0


def _focal_loss_kernel(logits_ref, targets_ref, loss_ref, *, n_valid, tile_n,
                       alpha, gamma, reduce):
    i = pl.program_id(0)
    x = logits_ref[...]                                  # (TILE_N, C) native dtype
    t = targets_ref[...]                                 # (TILE_N, 1) int32
    tn, c = x.shape

    # Row max and target-logit gather in the native dtype (both exact); only
    # the exp/sum/log path is widened to f32.
    m = jnp.max(x, axis=-1, keepdims=True)               # (TILE_N, 1)
    col = jax.lax.broadcasted_iota(jnp.int32, (1, c), 1)  # (1, C) -> broadcast rows
    zero = jnp.zeros((), dtype=x.dtype)
    x_t = jnp.sum(jnp.where(col == t, x, zero), axis=-1, keepdims=True)

    z = (x - m).astype(jnp.float32)                      # (TILE_N, C) f32
    sum_exp = jnp.sum(jnp.exp(z), axis=-1, keepdims=True)  # (TILE_N, 1) f32
    ce = jnp.log(sum_exp) + (m.astype(jnp.float32) - x_t.astype(jnp.float32))

    p = jnp.exp(-ce)
    d = jnp.maximum(1.0 - p, 0.0)                        # clamp ULP overshoot
    if gamma == 2.0:
        w = d * d                                        # VPU multiply, not EUP pow
    else:
        w = d ** gamma
    loss = w * ce
    if alpha != 1.0:
        loss = alpha * loss

    # Zero rows past the true batch size (boundary-block garbage).  jnp.where
    # is a SELECT, so NaN/Inf from garbage rows cannot leak.
    row = i * tile_n + jax.lax.broadcasted_iota(jnp.int32, (tn, 1), 0)
    loss = jnp.where(row < n_valid, loss, 0.0)

    if reduce:
        # One full (8,128) vreg per tile carrying the tile's partial sum
        # (splatted); a single unmasked store, no per-row lane-1 stores.
        tile_sum = jnp.sum(loss, keepdims=True)          # (1, 1) f32
        loss_ref[...] = jnp.broadcast_to(tile_sum, (8, 128))
    else:
        loss_ref[...] = loss


def focal_loss(logits, targets, alpha=ALPHA, gamma=GAMMA, reduce=True):
    """logits: (N, C) float, targets: (N,) int. Mirrors PyTorch FocalLoss."""
    n, c = logits.shape

    # Sublane granularity for the logits dtype (8 for 4-byte, 16 for 2-byte).
    itemsize = jnp.dtype(logits.dtype).itemsize
    sublane = {4: 8, 2: 16, 1: 32}.get(itemsize, 8)

    # ~6 MiB of logits per pipeline buffer (double-buffered -> ~12 MiB plus
    # elementwise temporaries), rounded to the sublane multiple.
    tile_n = (6 * 1024 * 1024) // max(c * itemsize, 1)
    tile_n = max(sublane, (tile_n // sublane) * sublane)
    if n < sublane:
        tile_n = n                                   # block == full array dims
    else:
        tile_n = min(tile_n, (n // sublane) * sublane)
    num_tiles = pl.cdiv(n, tile_n)

    targets2d = targets.astype(jnp.int32).reshape(n, 1)

    kernel = functools.partial(_focal_loss_kernel, n_valid=n, tile_n=tile_n,
                               alpha=float(alpha), gamma=float(gamma),
                               reduce=bool(reduce))

    if reduce:
        out_shape = jax.ShapeDtypeStruct((num_tiles * 8, 128), jnp.float32)
        out_spec = pl.BlockSpec((8, 128), lambda i: (i, 0))
        out_bytes = num_tiles * 8 * 128 * 4
    else:
        out_shape = jax.ShapeDtypeStruct((n, 1), jnp.float32)
        out_spec = pl.BlockSpec((tile_n, 1), lambda i: (i, 0))
        out_bytes = n * 4

    cost = pl.CostEstimate(
        flops=8 * n * c,
        transcendentals=n * c + 2 * n,
        bytes_accessed=n * c * itemsize + n * 4 + out_bytes,
    )

    out = pl.pallas_call(
        kernel,
        out_shape=out_shape,
        grid=(num_tiles,),
        in_specs=[
            pl.BlockSpec((tile_n, c), lambda i: (i, 0)),
            pl.BlockSpec((tile_n, 1), lambda i: (i, 0)),
        ],
        out_specs=out_spec,
        compiler_params=pltpu.CompilerParams(
            dimension_semantics=("parallel",),
            vmem_limit_bytes=64 * 1024 * 1024,
        ),
        cost_estimate=cost,
    )(logits, targets2d)

    if reduce:
        # Each tile's (8,128) block holds its partial sum splatted; padded /
        # masked rows contributed exactly 0, so sum / n == mean over real rows.
        partials = out.reshape(num_tiles, 8 * 128)[:, 0]
        return jnp.sum(partials) / n
    return out[:, 0]


def focal_loss_ref(logits, targets, alpha=ALPHA, gamma=GAMMA, reduce=True):
    # Pure-JAX reference (mirrors the PyTorch module).
    logp = jax.nn.log_softmax(logits.astype(jnp.float32), axis=-1)
    ce = -jnp.take_along_axis(logp, targets[:, None].astype(jnp.int32), axis=-1)[:, 0]
    p = jnp.exp(-ce)
    loss = alpha * (1.0 - p) ** gamma * ce
    return jnp.mean(loss) if reduce else loss


if __name__ == "__main__":
    key = jax.random.PRNGKey(0)

    # Case 1: nicely-shaped batch (8 samples, 32 classes).
    k1, k2, k3, k4 = jax.random.split(key, 4)
    N1, C1 = 8, 32
    logits1 = jax.random.normal(k1, (N1, C1), dtype=jnp.float32)
    targets1 = jax.random.randint(k2, (N1,), 0, C1, dtype=jnp.int32)
    out1 = jax.block_until_ready(focal_loss(logits1, targets1))
    ref1 = focal_loss_ref(logits1, targets1)
    assert jnp.allclose(out1, ref1, rtol=1e-5, atol=1e-5), (out1, ref1)

    # Case 1b: reduce=False per-element losses.
    out1b = jax.block_until_ready(focal_loss(logits1, targets1, reduce=False))
    ref1b = focal_loss_ref(logits1, targets1, reduce=False)
    assert jnp.allclose(out1b, ref1b, rtol=1e-5, atol=1e-5), (out1b, ref1b)

    # Case 2: ragged batch / odd class count (exercises boundary-block masking,
    # no HBM-side padding of logits).
    N2, C2 = 13, 37
    logits2 = jax.random.normal(k3, (N2, C2), dtype=jnp.float32)
    targets2 = jax.random.randint(k4, (N2,), 0, C2, dtype=jnp.int32)
    out2 = jax.block_until_ready(focal_loss(logits2, targets2))
    ref2 = focal_loss_ref(logits2, targets2)
    assert jnp.allclose(out2, ref2, rtol=1e-5, atol=1e-5), (out2, ref2)

    # Case 2b: ragged batch, reduce=False (boundary output block writeback).
    out2b = jax.block_until_ready(focal_loss(logits2, targets2, reduce=False))
    ref2b = focal_loss_ref(logits2, targets2, reduce=False)
    assert jnp.allclose(out2b, ref2b, rtol=1e-5, atol=1e-5), (out2b, ref2b)

    print("KERNEL_OK")
</pallas_src>

<mosaic_0001>
module attributes {stable_mosaic.version = 11 : i64} {
  func.func @_focal_loss_kernel(%arg0: i32, %arg1: memref<8x32xf32, #tpu.memory_space<vmem>>, %arg2: memref<8x1xi32, #tpu.memory_space<vmem>>, %arg3: memref<8x128xf32, #tpu.memory_space<vmem>>) attributes {dimension_semantics = [#tpu.dimension_semantics<parallel>], iteration_bounds = array<i64: 1>, scalar_prefetch = 0 : i64, scratch_operands = 0 : i64, tpu.core_type = #tpu.core_type<tc>, window_params = [{transform_indices = @transform_0, window_bounds = array<i64: 8, 32>}, {transform_indices = @transform_1, window_bounds = array<i64: 8, 1>}, {transform_indices = @transform_2, window_bounds = array<i64: 8, 128>}]} {
    %c0 = arith.constant 0 : index
    %c0_0 = arith.constant 0 : index
    %0 = vector.load %arg1[%c0, %c0_0] : memref<8x32xf32, #tpu.memory_space<vmem>>, vector<8x32xf32>
    %c0_1 = arith.constant 0 : index
    %c0_2 = arith.constant 0 : index
    %1 = vector.load %arg2[%c0_1, %c0_2] : memref<8x1xi32, #tpu.memory_space<vmem>>, vector<8x1xi32>
    %cst = arith.constant dense<0xFF800000> : vector<8xf32>
    %2 = vector.multi_reduction <maximumf>, %0, %cst [1] : vector<8x32xf32> to vector<8xf32>
    %3 = vector.shape_cast %2 : vector<8xf32> to vector<8x1xf32>
    %4 = tpu.iota {dimensions = array<i32: 1>} : vector<1x32xi32>
    %5 = vector.broadcast %4 : vector<1x32xi32> to vector<8x32xi32>
    %6 = vector.broadcast %1 : vector<8x1xi32> to vector<8x32xi32>
    %7 = arith.cmpi eq, %5, %6 : vector<8x32xi32>
    %cst_3 = arith.constant 0.000000e+00 : f32
    %8 = vector.broadcast %cst_3 : f32 to vector<8x32xf32>
    %9 = arith.select %7, %0, %8 : vector<8x32xi1>, vector<8x32xf32>
    %cst_4 = arith.constant dense<0.000000e+00> : vector<8xf32>
    %10 = vector.multi_reduction <add>, %9, %cst_4 [1] : vector<8x32xf32> to vector<8xf32>
    %11 = vector.shape_cast %10 : vector<8xf32> to vector<8x1xf32>
    %12 = vector.broadcast %3 : vector<8x1xf32> to vector<8x32xf32>
    %13 = arith.subf %0, %12 : vector<8x32xf32>
    %14 = math.exp %13 : vector<8x32xf32>
    %cst_5 = arith.constant dense<0.000000e+00> : vector<8xf32>
    %15 = vector.multi_reduction <add>, %14, %cst_5 [1] : vector<8x32xf32> to vector<8xf32>
    %16 = vector.shape_cast %15 : vector<8xf32> to vector<8x1xf32>
    %17 = math.log %16 : vector<8x1xf32>
    %18 = arith.subf %3, %11 : vector<8x1xf32>
    %19 = arith.addf %17, %18 : vector<8x1xf32>
    %cst_6 = arith.constant 0.000000e+00 : f32
    %20 = vector.broadcast %cst_6 : f32 to vector<8x1xf32>
    %21 = arith.subf %20, %19 : vector<8x1xf32>
    %22 = math.exp %21 : vector<8x1xf32>
    %cst_7 = arith.constant 1.000000e+00 : f32
    %23 = vector.broadcast %cst_7 : f32 to vector<8x1xf32>
    %24 = arith.subf %23, %22 : vector<8x1xf32>
    %cst_8 = arith.constant 0.000000e+00 : f32
    %25 = vector.broadcast %cst_8 : f32 to vector<8x1xf32>
    %26 = arith.maximumf %24, %25 : vector<8x1xf32>
    %27 = arith.mulf %26, %26 : vector<8x1xf32>
    %28 = arith.mulf %27, %19 : vector<8x1xf32>
    %c8_i32 = arith.constant 8 : i32
    %29 = arith.muli %arg0, %c8_i32 : i32
    %30 = tpu.iota {dimensions = array<i32: 0>} : vector<8x1xi32>
    %31 = vector.broadcast %29 : i32 to vector<8x1xi32>
    %32 = arith.addi %31, %30 : vector<8x1xi32>
    %c8_i32_9 = arith.constant 8 : i32
    %33 = vector.broadcast %c8_i32_9 : i32 to vector<8x1xi32>
    %34 = arith.cmpi slt, %32, %33 : vector<8x1xi32>
    %cst_10 = arith.constant 0.000000e+00 : f32
    %35 = vector.broadcast %cst_10 : f32 to vector<8x1xf32>
    %36 = arith.select %34, %28, %35 : vector<8x1xi1>, vector<8x1xf32>
    %37 = vector.shape_cast %36 : vector<8x1xf32> to vector<1x8x1xf32>
    %cst_11 = arith.constant dense<0.000000e+00> : vector<1xf32>
    %38 = vector.multi_reduction <add>, %37, %cst_11 [1, 2] : vector<1x8x1xf32> to vector<1xf32>
    %39 = vector.shape_cast %38 : vector<1xf32> to vector<1x1x1xf32>
    %40 = vector.extract %39[0, 0, 0] : f32 from vector<1x1x1xf32>
    %41 = vector.broadcast %40 : f32 to vector<1x1xf32>
    %42 = vector.shape_cast %41 : vector<1x1xf32> to vector<1x1xf32>
    %43 = vector.broadcast %42 : vector<1x1xf32> to vector<8x128xf32>
    %c0_12 = arith.constant 0 : index
    %c0_13 = arith.constant 0 : index
    %44 = vector.load %arg3[%c0_12, %c0_13] : memref<8x128xf32, #tpu.memory_space<vmem>>, vector<8x128xf32>
    tpu.vector_store %arg3[%c0_12, %c0_13], %43 {strides = array<i32>} : memref<8x128xf32, #tpu.memory_space<vmem>>, vector<8x128xf32>,
    return
  }
  func.func @transform_0(%arg0: i32) -> (i32, i32) {
    %c0_i32 = arith.constant 0 : i32
    %c0_i32_0 = arith.constant 0 : i32
    return %arg0, %c0_i32 : i32, i32
  }
  func.func @transform_1(%arg0: i32) -> (i32, i32) {
    %c0_i32 = arith.constant 0 : i32
    %c0_i32_0 = arith.constant 0 : i32
    return %arg0, %c0_i32 : i32, i32
  }
  func.func @transform_2(%arg0: i32) -> (i32, i32) {
    %c0_i32 = arith.constant 0 : i32
    %c0_i32_0 = arith.constant 0 : i32
    return %arg0, %c0_i32 : i32, i32
  }
}

</mosaic_0001>

<llo_original>
// kernel: tpu_custom_call.1
$region0: #{tpu_custom_call.1}
  #allocation0 [shape = 'u32[]', space=smem, size = 0x4, offset = 0x4, fixed_abs, tag = 'smem constant byte address 0x4 - core index']
  #allocation1 [shape = 'u32[72,128]{1,0:T(1,128)}', space=vmem, size = 0x9000, scoped, tag = 'internal scratch']
  %s0 = inlined_call_operand.vmem [shape: f32[8,32], index: 0, kind: input, shape index: {}]
  %s1 = inlined_call_operand.vmem [shape: s32[8,1], index: 1, kind: input, shape index: {}]
  %s2 = inlined_call_operand.hbm [shape: f32[8,128], index: 2, kind: output, shape index: {}]
  %s3 = sld [smem:[#allocation0]]
  $region18: #{tpu_custom_call.1} parent=0
    _
  %s5 = ssub.s32 1, %s3
  %s6 = scalar_select 0, %s5, %s3
  $region1: #{tpu_custom_call.1} parent=0
    #allocation2 [shape = 'u8[4096]{0}', space=vmem, size = 0x1000, scoped, tag = 'output window, operand 0, single buffered']
    #allocation3 [shape = 's32[1]{0}', space=sflag, size = 0x4, scoped, tag = 'scoped memory for tpu_custom_call.1']
    %7 = vsyncpa [#allocation3], 0
    // Predicated region
    $region2: #{tpu_custom_call.1} parent=1 // pred_check
      _
    $region3: #{tpu_custom_call.1} parent=1 // pred_check_branch
      %9 = sbr.rel (0) target = $region5
    $region4: #{tpu_custom_call.1} parent=1 // pred_region
      _
    $region5: #{tpu_custom_call.1} parent=1 // pred_fallthru
      _
    // Predicated region
    $region6: #{tpu_custom_call.1} parent=1 // pred_check
      _
    $region7: #{tpu_custom_call.1} parent=1 // pred_check_branch
      %11 = sbr.rel (0) target = $region9
    $region8: #{tpu_custom_call.1} parent=1 // pred_region
      _
    $region9: #{tpu_custom_call.1} parent=1 // pred_fallthru
      _
    %v12 = vld [vmem:[%s0] sm:$0xff]
    %v13 = vld [vmem:[%s1] sm:$0xff]
    %vm14 = vcmask 261120
    %v15 = vsel %vm14, %v12, -inf
    %16 = vmax.xlane.f32.xlu0 %v15
    %v17 = vpop.xlane.xlu0 %16
    %v18 = vlaneseq
    %v19 = vand.u32 %v18, 127
    %20 = vset.pattern.permute.xlu0 0
    %21 = vperm.xlu0 %20, %v13
    %v22 = vpop.permute.xlu0 %21
    %vm23 = vcmp.eq.s32.totalorder %v19, %v22
    %v24 = vsel %vm23, %v12, 0.0
    %v25 = vsel %vm14, %v24, 0.0
    %26 = vadd.xlane.f32.xlu0 %v25
    %v27 = vpop.xlane.xlu0 %26
    %v28 = vsub.f32 %v12, %v17
    %v29 = vmul.f32 %v28, 1.442695
    %v30 = vpow.pop %v29
    %v31 = vsel %vm14, %v30, 0.0
    %32 = vadd.xlane.f32.xlu0 %v31
    %v33 = vpop.xlane.xlu0 %32
    %v34 = vlog2.pop %v33
    %v35 = vmul.f32 %v34, 0.6931472
    %v36 = vsub.f32 %v17, %v27
    %v37 = vadd.f32 %v35, %v36
    %v38 = vsub.f32 0.0, %v37
    %v39 = vmul.f32 %v38, 1.442695
    %v40 = vpow.pop %v39
    %v41 = vsub.f32 1.0, %v40
    %v42 = vmax.f32 %v41, 0.0
    %v43 = vmul.f32 %v42, %v42
    %v44 = vmul.f32 %v43, %v37
    %s45 = smul.u32 0, 8
    %v46 = vlaneseq
    %v47 = vshrl.u32 %v46, 7
    %v48 = vstv %s45
    %v49 = vadd.s32 %v48, %v47
    %vm50 = vcmp.lt.s32.totalorder %v49, 8
    %v51 = vsel %vm50, %v44, 0.0
    %vm52 = vcmask 7168
    %v53 = vsel %vm52, %v51, 0.0
    %54 = vadd.xlane.f32.xlu0 %v53
    %v55 = vpop.xlane.xlu0 %54
    %v56 = vrot.slane %v55, 4
    %v57 = vadd.f32 %v55, %v56
    %v58 = vrot.slane %v57, 2
    %v59 = vadd.f32 %v57, %v58
    %v60 = vrot.slane %v59, 1
    %v61 = vadd.f32 %v59, %v60
    %s62 = vtos %v61
    %v63 = vstv %s62
    %64 = vst [vmem:[#allocation2] sm:$0xff] %v63
    // Predicated region
    $region10: #{tpu_custom_call.1} parent=1 // pred_check
      _
    $region11: #{tpu_custom_call.1} parent=1 // pred_check_branch
      %66 = sbr.rel (0) target = $region13
    $region12: #{tpu_custom_call.1} parent=1 // pred_region
      %68 = vsyncadd [#allocation3], 0
      %s70 = sshll.u32 [#allocation2], 4
      %s71 = int_to_ptr.vmem [resolvable:$true] %s70
      %s72 = sshll.u32 %s2, 4
      %s73 = int_to_ptr.hbm [resolvable:$true] %s72
      %75 = dma.vmem_to_hbm [thread:$0]  %s71, 128, %s73, [#allocation3]
    $region13: #{tpu_custom_call.1} parent=1 // pred_fallthru
      _
    // Predicated region
    $region14: #{tpu_custom_call.1} parent=1 // pred_check
      _
    $region15: #{tpu_custom_call.1} parent=1 // pred_check_branch
      %77 = sbr.rel (0) target = $region17
    $region16: #{tpu_custom_call.1} parent=1 // pred_region
      %79 = dma.done [#allocation3], 128
    $region17: #{tpu_custom_call.1} parent=1 // pred_fallthru
      _
    %80 = vsyncpa [#allocation3], 1

</llo_original>
